<compile_context>
chip_gen: v5e
topology: v5e:2x2
jax: 0.10.0
libtpu: 0.0.40
codegen_flags: <defaults>
</compile_context>

<pallas_src>
import math
import numpy as np
import jax
import jax.numpy as jnp
from jax.experimental import pallas as pl
from jax.experimental.pallas import tpu as pltpu

# ------------------------- configuration -------------------------
SEQ_LEN  = 16          # sequence_length (history length L)
PRED_LEN = 8           # prediction_length (P)
C_IN     = 4           # input_channels
C_EX     = 3           # extra_channels
C_ST     = 2           # static_channels
HID      = 32          # hidden_channels
FF       = 32          # ff_dim
C_OUT    = C_IN        # output_channels (defaults to input_channels)
SAE_HID  = 64          # SparseAutoEncoder hidden size (hard-coded in module)
LN_EPS   = 1e-5
BATCH    = 2

CT     = C_IN + C_EX        # channels after cat([x_hist, x_extra_hist]) = 7
HF     = HID + FF           # fused proj+fc1 output width per branch = 64
OUT_W  = 2 * C_OUT + C_EX   # packed kernel output width (mu | sigma | xef) = 11
SLAB_W = 128                # packed weight-slab lane width (one full vreg)


# ------------------------- shared math (reference) -------------------------
def _linear(x, wt, b):
    return jnp.dot(x, wt, preferred_element_type=jnp.float32) + b


def _layernorm2d(x, w, b):
    # PyTorch nn.LayerNorm over the last TWO dims (time, channels) of one sample.
    m = jnp.mean(x, axis=(0, 1), keepdims=True)
    v = jnp.mean((x - m) ** 2, axis=(0, 1), keepdims=True)
    return (x - m) * jax.lax.rsqrt(v + LN_EPS) * w + b


def _softplus(x):
    # nn.Softplus(beta=1, threshold=20)
    return jnp.where(x > 20.0, x, jnp.log1p(jnp.exp(jnp.minimum(x, 20.0))))


def _forward_math(p, xh, xeh, xef, xs):
    """Single-sample reference with the ORIGINAL module structure (concats,
    broadcasts, separate linears, 2-stage SAE)."""
    # 1) sparse auto-encoder residual on future extras
    h_sae = _linear(xef, p["sae_enc_wt"], p["sae_enc_b"])             # (P, 64)
    xef2 = xef + _linear(h_sae, p["sae_dec_wt"], p["sae_dec_b"])      # (P, C_EX)

    # 2) history: concat channels, mix time L -> P
    xcat = jnp.concatenate([xh, xeh], axis=-1)                        # (L, CT)
    xhist = jnp.dot(p["fc_hist_w"], xcat,
                    preferred_element_type=jnp.float32) + p["fc_hist_b"]

    # 3) conditional feature mixing (history)
    vh = jnp.broadcast_to(_linear(xs, p["frs_h_wt"], p["frs_h_b"]), (PRED_LEN, HID))
    zh = jnp.concatenate([xhist, vh], axis=-1)
    projh = _linear(zh, p["fmh_proj_wt"], p["fmh_proj_b"])
    uh = jnp.maximum(_linear(zh, p["fmh_fc1_wt"], p["fmh_fc1_b"]), 0.0)
    uh = _linear(uh, p["fmh_fc2_wt"], p["fmh_fc2_b"])
    x_hist_mix = projh + _layernorm2d(uh, p["fmh_ln_w"], p["fmh_ln_b"])

    # 4) conditional feature mixing (future)
    vf = jnp.broadcast_to(_linear(xs, p["frs_f_wt"], p["frs_f_b"]), (PRED_LEN, HID))
    zf = jnp.concatenate([xef2, vf], axis=-1)
    projf = _linear(zf, p["fmf_proj_wt"], p["fmf_proj_b"])
    uf = jnp.maximum(_linear(zf, p["fmf_fc1_wt"], p["fmf_fc1_b"]), 0.0)
    uf = _linear(uf, p["fmf_fc2_wt"], p["fmf_fc2_b"])
    x_fut_mix = projf + _layernorm2d(uf, p["fmf_ln_w"], p["fmf_ln_b"])

    x = jnp.concatenate([x_hist_mix, x_fut_mix], axis=-1)             # (P, 2*HID)

    # 5) conditional mixer layer (2*HID -> HID)
    vm = jnp.broadcast_to(_linear(xs, p["frs_m_wt"], p["frs_m_b"]), (PRED_LEN, HID))
    xres = jnp.maximum(
        jnp.dot(p["tm_w"], x, preferred_element_type=jnp.float32) + p["tm_b"], 0.0)
    xtm = _layernorm2d(x + xres, p["tm_ln_w"], p["tm_ln_b"])
    zm = jnp.concatenate([xtm, vm], axis=-1)
    projm = _linear(zm, p["fmm_proj_wt"], p["fmm_proj_b"])
    um = jnp.maximum(_linear(zm, p["fmm_fc1_wt"], p["fmm_fc1_b"]), 0.0)
    um = _linear(um, p["fmm_fc2_wt"], p["fmm_fc2_b"])
    x = projm + _layernorm2d(um, p["fmm_ln_w"], p["fmm_ln_b"])

    # 6) heads
    mu = _linear(x, p["fc_out_wt"], p["fc_out_b"])
    sigma = _softplus(_linear(x, p["fc_presig_wt"], p["fc_presig_b"]))
    return mu, sigma, xef2


def reference_forward(params, x_hist, x_extra_hist, x_extra_future, x_static):
    x_static3 = x_static[:, None, :]
    def one(xh, xeh, xef, xs):
        return _forward_math(params, xh, xeh, xef, xs)
    return jax.vmap(one)(x_hist, x_extra_hist, x_extra_future, x_static3)


# ------------------------- weight packing (wrapper-side, exact algebra) -------
def _np(a):
    return np.asarray(a, np.float32)


def _pack(entries, dtype):
    """Pack a list of (name, 2-D array) into one (R, SLAB_W) slab (row-padded to
    sublane tiles).  Returns (slab, layout) with layout[name] = (row_off, rows, cols)."""
    layout, off = {}, 0
    for name, a in entries:
        r, c = a.shape
        assert c <= SLAB_W, f"{name}: width {c} exceeds SLAB_W={SLAB_W}"
        layout[name] = (off, r, c)
        off += ((r + 7) // 8) * 8
    slab = np.zeros((off, SLAB_W), np.float32)
    for name, a in entries:
        o, r, c = layout[name]
        slab[o:o + r, :c] = a
    return jnp.asarray(slab, dtype), layout


def pack_weights(p, tb):
    """Fold/fuse all module parameters into two packed slabs:
       * bf16 slab : every MXU matmul weight (fused / block-diagonal, 128-lane wide
                     where the algebra allows)
       * f32 slab  : biases, LayerNorm affines and the per-sample averaging matrix
                     (keeps the LN-statistics path in f32).
    """
    assert tb * SEQ_LEN <= SLAB_W and tb * PRED_LEN <= SLAB_W, (
        "kron block-diagonal time-mix weights exceed SLAB_W; rework fchist/tm/avg "
        "as per-sample dense matmuls before raising the batch tile")
    # TODO(synk): replace the O(tb^2) kron block-diagonal fc_hist/tm/avg weights with
    # per-sample dense matmuls before scaling the batch tile past tb=8.

    def split_fold(prefix, main_ch, frs_prefix):
        # [x_main | v_static] @ [proj | fc1]  ==  x_main @ W_top
        #   + x_static @ (frs_W @ W_tail) + (frs_b @ W_tail + [proj_b | fc1_b])
        wp, w1 = _np(p[prefix + "_proj_wt"]), _np(p[prefix + "_fc1_wt"])
        bp, b1 = _np(p[prefix + "_proj_b"]), _np(p[prefix + "_fc1_b"])
        fw, fb = _np(p[frs_prefix + "_wt"]), _np(p[frs_prefix + "_b"])
        return (wp[:main_ch], w1[:main_ch],
                fw @ wp[main_ch:], fw @ w1[main_ch:],
                fb @ wp[main_ch:] + bp, fb @ w1[main_ch:] + b1)

    hp, h1, hps, h1s, hpb, h1b = split_fold("fmh", CT, "frs_h")
    fp, f1, fps, f1s, fpb, f1b = split_fold("fmf", C_EX, "frs_f")
    mp, m1, mps, m1s, mpb, m1b = split_fold("fmm", 2 * HID, "frs_m")

    # fused hist+future branch weight; LHS = [xhist | xef2 | xs] (12 lanes),
    # output lanes [proj_h(32) | proj_f(32) | fc1_h(32) | fc1_f(32)]
    w_hf = np.zeros((CT + C_EX + C_ST, 2 * HF), np.float32)          # (12, 128)
    w_hf[:CT, 0:HID] = hp
    w_hf[:CT, 2 * HID:2 * HID + FF] = h1
    w_hf[CT:CT + C_EX, HID:2 * HID] = fp
    w_hf[CT:CT + C_EX, 2 * HID + FF:] = f1
    w_hf[CT + C_EX:, 0:HID] = hps
    w_hf[CT + C_EX:, HID:2 * HID] = fps
    w_hf[CT + C_EX:, 2 * HID:2 * HID + FF] = h1s
    w_hf[CT + C_EX:, 2 * HID + FF:] = f1s
    b_hf = np.concatenate([hpb, fpb, h1b, f1b], axis=1)              # (1, 128)

    # block-diagonal fc2 for both branches: [relu(fc1_h)|relu(fc1_f)] -> [u_h|u_f]
    w2_hf = np.zeros((2 * FF, 2 * HID), np.float32)                  # (64, 64)
    w2_hf[:FF, :HID] = _np(p["fmh_fc2_wt"])
    w2_hf[FF:, HID:] = _np(p["fmf_fc2_wt"])
    b2_hf = np.concatenate([_np(p["fmh_fc2_b"]), _np(p["fmf_fc2_b"])], axis=1)

    # fused conditional-mixer feature weight; LHS = [xtm | xs] (66 lanes),
    # output lanes [proj_m(32) | fc1_m(32)]
    w_m = np.zeros((2 * HID + C_ST, HF), np.float32)                 # (66, 64)
    w_m[:2 * HID, :HID] = mp
    w_m[:2 * HID, HID:] = m1
    w_m[2 * HID:, :HID] = mps
    w_m[2 * HID:, HID:] = m1s
    b_m = np.concatenate([mpb, m1b], axis=1)                         # (1, 64)

    eye_tb = np.eye(tb, dtype=np.float32)

    bf16_entries = [
        # SparseAutoEncoder: dec(enc(x)) = x @ (We Wd)   (no nonlinearity -> exact)
        ("sae_w", _np(p["sae_enc_wt"]) @ _np(p["sae_dec_wt"])),          # (3, 3)
        # time mixing L->P, block-diagonal over the batch tile
        ("fchist_bd", np.kron(eye_tb, _np(p["fc_hist_w"]))),             # (tb*P, tb*L)
        ("w_hf", w_hf), ("w2_hf", w2_hf),
        ("tm_bd", np.kron(eye_tb, _np(p["tm_w"]))),                      # (tb*P, tb*P)
        ("w_m", w_m),
        ("w2_m", _np(p["fmm_fc2_wt"])),                                  # (32, 32)
        ("whead", np.concatenate([_np(p["fc_out_wt"]),
                                  _np(p["fc_presig_wt"])], axis=1)),     # (32, 8)
    ]
    f32_entries = [
        ("sae_b", _np(p["sae_enc_b"]) @ _np(p["sae_dec_wt"]) + _np(p["sae_dec_b"])),
        ("fchist_b", np.tile(_np(p["fc_hist_b"]), (tb, 1))),
        ("b_hf", b_hf), ("b2_hf", b2_hf),
        ("ln_hf_w", np.tile(np.concatenate([_np(p["fmh_ln_w"]),
                                            _np(p["fmf_ln_w"])], axis=1), (tb, 1))),
        ("ln_hf_b", np.tile(np.concatenate([_np(p["fmh_ln_b"]),
                                            _np(p["fmf_ln_b"])], axis=1), (tb, 1))),
        ("tm_b", np.tile(_np(p["tm_b"]), (tb, 1))),
        ("tm_lnw", np.tile(_np(p["tm_ln_w"]), (tb, 1))),
        ("tm_lnb", np.tile(_np(p["tm_ln_b"]), (tb, 1))),
        ("b_m", b_m),
        ("b2_m", _np(p["fmm_fc2_b"])),
        ("ln_m_w", np.tile(_np(p["fmm_ln_w"]), (tb, 1))),
        ("ln_m_b", np.tile(_np(p["fmm_ln_b"]), (tb, 1))),
        ("bhead", np.concatenate([_np(p["fc_out_b"]), _np(p["fc_presig_b"])], axis=1)),
        # per-sample block-averaging matrix for LayerNorm stats (f32 path)
        ("avg", np.kron(eye_tb, np.full((PRED_LEN, PRED_LEN),
                                        1.0 / PRED_LEN, np.float32))),
    ]
    slab_bf, lay_bf = _pack(bf16_entries, jnp.bfloat16)
    slab_f32, lay_f32 = _pack(f32_entries, jnp.float32)
    return slab_bf, lay_bf, slab_f32, lay_f32


# ------------------------- Pallas kernel -------------------------
def _make_kernel(lay_bf, lay_f32):
    def kernel(xcat_ref, xef_ref, xs_ref, wbf_ref, wf32_ref, out_ref):
        def wb(name):                       # bf16 matmul weight (static row window)
            o, r, c = lay_bf[name]
            return wbf_ref[o:o + r, 0:c]

        def wf(name):                       # f32 bias / LN / avg (static row window)
            o, r, c = lay_f32[name]
            return wf32_ref[o:o + r, 0:c]

        def mm(a, b):                       # bf16 MXU matmul, f32 accumulate
            return jnp.dot(a.astype(jnp.bfloat16), b,
                           preferred_element_type=jnp.float32)

        def mmf(a, b):                      # f32 matmul (LayerNorm statistics path)
            return jnp.dot(a, b, preferred_element_type=jnp.float32)

        avg = wf("avg")

        def ln_stats(x):
            # ONE avg matmul per LN group: per-sample row means of [x | x*x]
            return mmf(avg, jnp.concatenate([x, x * x], axis=-1))

        def norm(x, s, lo, width, s_off):
            # normalize lanes [lo, lo+width) of x using stats s (var = E[x^2]-m^2)
            m = jnp.mean(s[:, lo:lo + width], axis=-1, keepdims=True)
            e2 = jnp.mean(s[:, s_off + lo:s_off + lo + width], axis=-1, keepdims=True)
            v = jnp.maximum(e2 - m * m, 0.0)
            return (x[:, lo:lo + width] - m) * jax.lax.rsqrt(v + LN_EPS)

        xcat = xcat_ref[...]                # (tb*L, CT)
        xef = xef_ref[...]                  # (tb*P, C_EX)
        xs = xs_ref[...]                    # (tb*P, C_ST)  static row-replicated

        # 1) SparseAutoEncoder residual (Linear∘Linear collapsed)
        xef2 = xef + mm(xef, wb("sae_w")) + wf("sae_b")                  # (R, C_EX)

        # 2) history time mixing L -> P (block-diagonal over batch tile)
        xhist = mm(wb("fchist_bd"), xcat) + wf("fchist_b")               # (R, CT)

        # 3+4) fused hist/future feature-mixing branches (static rows in the weight)
        xin = jnp.concatenate([xhist, xef2, xs], axis=-1)                # (R, 12)
        pf = mm(xin, wb("w_hf")) + wf("b_hf")                            # (R, 128)
        u = mm(jnp.maximum(pf[:, 2 * HID:], 0.0), wb("w2_hf")) + wf("b2_hf")  # (R, 64)
        s = ln_stats(u)                                                  # (R, 128)
        n = jnp.concatenate([norm(u, s, 0, HID, 2 * HID),
                             norm(u, s, HID, HID, 2 * HID)], axis=-1)    # (R, 64)
        x = pf[:, :2 * HID] + n * wf("ln_hf_w") + wf("ln_hf_b")          # (R, 2*HID)

        # 5) conditional mixer layer (2*HID -> HID)
        xres = jnp.maximum(mm(wb("tm_bd"), x) + wf("tm_b"), 0.0)
        y = x + xres
        s = ln_stats(y)                                                  # (R, 128)
        xtm = norm(y, s, 0, 2 * HID, 2 * HID) * wf("tm_lnw") + wf("tm_lnb")
        zin = jnp.concatenate([xtm, xs], axis=-1)                        # (R, 66)
        pf = mm(zin, wb("w_m")) + wf("b_m")                              # (R, 64)
        u = mm(jnp.maximum(pf[:, HID:], 0.0), wb("w2_m")) + wf("b2_m")   # (R, HID)
        s = ln_stats(u)                                                  # (R, 64)
        xm = pf[:, :HID] + norm(u, s, 0, HID, HID) * wf("ln_m_w") + wf("ln_m_b")

        # 6) fused heads + direct column-window stores (no output concat)
        head = mm(xm, wb("whead")) + wf("bhead")                         # (R, 2*C_OUT)
        out_ref[:, 0:C_OUT] = head[:, :C_OUT]
        out_ref[:, C_OUT:2 * C_OUT] = _softplus(head[:, C_OUT:])
        out_ref[:, 2 * C_OUT:OUT_W] = xef2

    return kernel


# ------------------------- wrapper -------------------------
def tsmixer_forward(x_hist, x_extra_hist, x_extra_future, x_static,
                    slab_bf, lay_bf, slab_f32, lay_f32, tb):
    B = x_hist.shape[0]
    assert B % tb == 0
    n_tiles = B // tb
    tbp, tbl = tb * PRED_LEN, tb * SEQ_LEN

    # wrapper-side input plumbing (flatten to 2-D, replicate static per row)
    xcat = jnp.concatenate([x_hist, x_extra_hist], axis=-1).reshape(B * SEQ_LEN, CT)
    xef = x_extra_future.reshape(B * PRED_LEN, C_EX)
    xs_rep = jnp.repeat(x_static, PRED_LEN, axis=0)                      # (B*P, C_ST)

    # only shard across TensorCores when a tile has a full-MXU-height M dim
    semantics = ("parallel",) if tbp >= 128 else ("arbitrary",)

    packed = pl.pallas_call(
        _make_kernel(lay_bf, lay_f32),
        out_shape=jax.ShapeDtypeStruct((B * PRED_LEN, OUT_W), jnp.float32),
        grid_spec=pltpu.PrefetchScalarGridSpec(
            num_scalar_prefetch=0,
            grid=(n_tiles,),
            in_specs=[
                pl.BlockSpec((tbl, CT), lambda i: (i, 0)),
                pl.BlockSpec((tbp, C_EX), lambda i: (i, 0)),
                pl.BlockSpec((tbp, C_ST), lambda i: (i, 0)),
                pl.BlockSpec(slab_bf.shape, lambda i: (0, 0)),    # bf16 weight slab
                pl.BlockSpec(slab_f32.shape, lambda i: (0, 0)),   # f32 bias/LN slab
            ],
            out_specs=pl.BlockSpec((tbp, OUT_W), lambda i: (i, 0)),
        ),
        compiler_params=pltpu.CompilerParams(dimension_semantics=semantics),
    )(xcat, xef, xs_rep, slab_bf, slab_f32)

    out3 = packed.reshape(B, PRED_LEN, OUT_W)
    mu = out3[..., :C_OUT]
    sigma = out3[..., C_OUT:2 * C_OUT]
    xef2 = out3[..., 2 * C_OUT:]
    return mu, sigma, xef2


# ------------------------- parameter construction -------------------------
def make_params(key):
    keys = iter(jax.random.split(key, 32))
    P = {}

    def torch_linear(k, out_f, in_f):
        k1, k2 = jax.random.split(k)
        bound = 1.0 / math.sqrt(in_f)
        w = jax.random.uniform(k1, (out_f, in_f), jnp.float32, -bound, bound)
        b = jax.random.uniform(k2, (out_f,), jnp.float32, -bound, bound)
        return w, b

    def lin_feat(name, in_f, out_f):        # applied as x @ W^T + b
        w, b = torch_linear(next(keys), out_f, in_f)
        P[name + "_wt"] = w.T
        P[name + "_b"] = b.reshape(1, out_f)

    def lin_time(name, in_f, out_f):        # applied as W @ x + b[:, None]
        w, b = torch_linear(next(keys), out_f, in_f)
        P[name + "_w"] = w
        P[name + "_b"] = b.reshape(out_f, 1)

    def ln(name, shape):
        P[name + "_w"] = jnp.ones(shape, jnp.float32)
        P[name + "_b"] = jnp.zeros(shape, jnp.float32)

    lin_feat("sae_enc", C_EX, SAE_HID)
    lin_feat("sae_dec", SAE_HID, C_EX)
    lin_time("fc_hist", SEQ_LEN, PRED_LEN)

    lin_feat("frs_h", C_ST, HID)
    lin_feat("fmh_proj", CT + HID, HID)
    lin_feat("fmh_fc1", CT + HID, FF)
    lin_feat("fmh_fc2", FF, HID)
    ln("fmh_ln", (PRED_LEN, HID))

    lin_feat("frs_f", C_ST, HID)
    lin_feat("fmf_proj", C_EX + HID, HID)
    lin_feat("fmf_fc1", C_EX + HID, FF)
    lin_feat("fmf_fc2", FF, HID)
    ln("fmf_ln", (PRED_LEN, HID))

    lin_feat("frs_m", C_ST, HID)
    lin_time("tm", PRED_LEN, PRED_LEN)
    ln("tm_ln", (PRED_LEN, 2 * HID))
    lin_feat("fmm_proj", 3 * HID, HID)
    lin_feat("fmm_fc1", 3 * HID, FF)
    lin_feat("fmm_fc2", FF, HID)
    ln("fmm_ln", (PRED_LEN, HID))

    lin_feat("fc_out", HID, C_OUT)
    lin_feat("fc_presig", HID, C_OUT)
    return P


# ------------------------- main -------------------------
if __name__ == "__main__":
    key = jax.random.PRNGKey(0)
    kp, k1, k2, k3, k4 = jax.random.split(key, 5)

    params = make_params(kp)
    x_hist = jax.random.normal(k1, (BATCH, SEQ_LEN, C_IN), jnp.float32)
    x_extra_hist = jax.random.normal(k2, (BATCH, SEQ_LEN, C_EX), jnp.float32)
    x_extra_future = jax.random.normal(k3, (BATCH, PRED_LEN, C_EX), jnp.float32)
    x_static = jax.random.normal(k4, (BATCH, C_ST), jnp.float32)

    # Whole batch in one grid step (BATCH=2 -> 16 rows: latency-bound; splitting it
    # across cores would only duplicate the slab DMA and per-step overhead).
    B_TILE = BATCH
    slab_bf, lay_bf, slab_f32, lay_f32 = pack_weights(params, B_TILE)

    mu, sigma, xef_out = tsmixer_forward(
        x_hist, x_extra_hist, x_extra_future, x_static,
        slab_bf, lay_bf, slab_f32, lay_f32, B_TILE)
    jax.block_until_ready((mu, sigma, xef_out))

    # sanity check vs. plain-JAX reference with the ORIGINAL module structure
    mu_r, sigma_r, xef_r = reference_forward(
        params, x_hist, x_extra_hist, x_extra_future, x_static)
    assert mu.shape == (BATCH, PRED_LEN, C_OUT)
    assert sigma.shape == (BATCH, PRED_LEN, C_OUT)
    assert xef_out.shape == (BATCH, PRED_LEN, C_EX)
    assert bool(jnp.all(jnp.isfinite(mu))) and bool(jnp.all(jnp.isfinite(sigma)))
    assert bool(jnp.all(sigma >= 0.0))
    # tolerance sized for bf16 matmul weights/operands (f32 accumulate + f32 LN stats)
    assert bool(jnp.allclose(mu, mu_r, rtol=5e-2, atol=5e-2))
    assert bool(jnp.allclose(sigma, sigma_r, rtol=5e-2, atol=5e-2))
    assert bool(jnp.allclose(xef_out, xef_r, rtol=5e-2, atol=5e-2))

    print("KERNEL_OK")
</pallas_src>

<mosaic_0001>
module attributes {stable_mosaic.version = 11 : i64} {
  func.func @kernel(%arg0: i32, %arg1: memref<32x7xf32, #tpu.memory_space<vmem>>, %arg2: memref<16x3xf32, #tpu.memory_space<vmem>>, %arg3: memref<16x2xf32, #tpu.memory_space<vmem>>, %arg4: memref<256x128xbf16, #tpu.memory_space<vmem>>, %arg5: memref<192x128xf32, #tpu.memory_space<vmem>>, %arg6: memref<16x11xf32, #tpu.memory_space<vmem>>) attributes {dimension_semantics = [#tpu.dimension_semantics<arbitrary>], iteration_bounds = array<i64: 1>, scalar_prefetch = 0 : i64, scratch_operands = 0 : i64, tpu.core_type = #tpu.core_type<tc>, window_params = [{transform_indices = @transform_0, window_bounds = array<i64: 32, 7>}, {transform_indices = @transform_1, window_bounds = array<i64: 16, 3>}, {transform_indices = @transform_2, window_bounds = array<i64: 16, 2>}, {pipeline_mode = #tpu.pipeline_mode<synchronous>, transform_indices = @transform_3, window_bounds = array<i64: 256, 128>}, {pipeline_mode = #tpu.pipeline_mode<synchronous>, transform_indices = @transform_4, window_bounds = array<i64: 192, 128>}, {transform_indices = @transform_5, window_bounds = array<i64: 16, 11>}]} {
    %c176 = arith.constant 176 : index
    %c0 = arith.constant 0 : index
    %0 = vector.load %arg5[%c176, %c0] : memref<192x128xf32, #tpu.memory_space<vmem>>, vector<16x16xf32>
    %c0_0 = arith.constant 0 : index
    %c0_1 = arith.constant 0 : index
    %1 = vector.load %arg1[%c0_0, %c0_1] : memref<32x7xf32, #tpu.memory_space<vmem>>, vector<32x7xf32>
    %c0_2 = arith.constant 0 : index
    %c0_3 = arith.constant 0 : index
    %2 = vector.load %arg2[%c0_2, %c0_3] : memref<16x3xf32, #tpu.memory_space<vmem>>, vector<16x3xf32>
    %c0_4 = arith.constant 0 : index
    %c0_5 = arith.constant 0 : index
    %3 = vector.load %arg3[%c0_4, %c0_5] : memref<16x2xf32, #tpu.memory_space<vmem>>, vector<16x2xf32>
    %c0_6 = arith.constant 0 : index
    %c0_7 = arith.constant 0 : index
    %4 = vector.load %arg4[%c0_6, %c0_7] : memref<256x128xbf16, #tpu.memory_space<vmem>>, vector<3x3xbf16>
    %5 = arith.truncf %2 : vector<16x3xf32> to vector<16x3xbf16>
    %cst = arith.constant dense<0.000000e+00> : vector<16x3xf32>
    %6 = tpu.matmul %5, %4, %cst {dimension_numbers = #tpu.dot_dimension_numbers<[1], [0], [0], [1], [0, 0, 1, 1], [], []>} : vector<16x3xbf16>, vector<3x3xbf16>, vector<16x3xf32> -> vector<16x3xf32>
    %7 = arith.addf %2, %6 : vector<16x3xf32>
    %c0_8 = arith.constant 0 : index
    %c0_9 = arith.constant 0 : index
    %8 = vector.load %arg5[%c0_8, %c0_9] : memref<192x128xf32, #tpu.memory_space<vmem>>, vector<1x3xf32>
    %9 = vector.broadcast %8 : vector<1x3xf32> to vector<16x3xf32>
    %10 = arith.addf %7, %9 : vector<16x3xf32>
    %c8 = arith.constant 8 : index
    %c0_10 = arith.constant 0 : index
    %11 = vector.load %arg4[%c8, %c0_10] : memref<256x128xbf16, #tpu.memory_space<vmem>>, vector<16x32xbf16>
    %cst_11 = arith.constant dense<0.000000e+00> : vector<16x7xf32>
    %12 = tpu.matmul %11, %1, %cst_11 {dimension_numbers = #tpu.dot_dimension_numbers<[1], [0], [0], [1], [0, 0, 1, 1], [], []>} : vector<16x32xbf16>, vector<32x7xf32>, vector<16x7xf32> -> vector<16x7xf32>
    %c8_12 = arith.constant 8 : index
    %c0_13 = arith.constant 0 : index
    %13 = vector.load %arg5[%c8_12, %c0_13] : memref<192x128xf32, #tpu.memory_space<vmem>>, vector<16x1xf32>
    %14 = vector.broadcast %13 : vector<16x1xf32> to vector<16x7xf32>
    %15 = arith.addf %12, %14 : vector<16x7xf32>
    %16 = tpu.concatenate %15, %10, %3 in 1 : vector<16x7xf32>, vector<16x3xf32>, vector<16x2xf32> -> vector<16x12xf32>
    %c24 = arith.constant 24 : index
    %c0_14 = arith.constant 0 : index
    %17 = vector.load %arg4[%c24, %c0_14] : memref<256x128xbf16, #tpu.memory_space<vmem>>, vector<12x128xbf16>
    %18 = arith.truncf %16 : vector<16x12xf32> to vector<16x12xbf16>
    %cst_15 = arith.constant dense<0.000000e+00> : vector<16x128xf32>
    %19 = tpu.matmul %18, %17, %cst_15 {dimension_numbers = #tpu.dot_dimension_numbers<[1], [0], [0], [1], [0, 0, 1, 1], [], []>} : vector<16x12xbf16>, vector<12x128xbf16>, vector<16x128xf32> -> vector<16x128xf32>
    %c24_16 = arith.constant 24 : index
    %c0_17 = arith.constant 0 : index
    %20 = vector.load %arg5[%c24_16, %c0_17] : memref<192x128xf32, #tpu.memory_space<vmem>>, vector<1x128xf32>
    %21 = vector.broadcast %20 : vector<1x128xf32> to vector<16x128xf32>
    %22 = arith.addf %19, %21 : vector<16x128xf32>
    %23 = vector.extract_strided_slice %22 {offsets = [0, 64], sizes = [16, 64], strides = [1, 1]} : vector<16x128xf32> to vector<16x64xf32>
    %cst_18 = arith.constant 0.000000e+00 : f32
    %24 = vector.broadcast %cst_18 : f32 to vector<16x64xf32>
    %25 = arith.maximumf %23, %24 : vector<16x64xf32>
    %c40 = arith.constant 40 : index
    %c0_19 = arith.constant 0 : index
    %26 = vector.load %arg4[%c40, %c0_19] : memref<256x128xbf16, #tpu.memory_space<vmem>>, vector<64x64xbf16>
    %27 = arith.truncf %25 : vector<16x64xf32> to vector<16x64xbf16>
    %cst_20 = arith.constant dense<0.000000e+00> : vector<16x64xf32>
    %28 = tpu.matmul %27, %26, %cst_20 {dimension_numbers = #tpu.dot_dimension_numbers<[1], [0], [0], [1], [0, 0, 1, 1], [], []>} : vector<16x64xbf16>, vector<64x64xbf16>, vector<16x64xf32> -> vector<16x64xf32>
    %c32 = arith.constant 32 : index
    %c0_21 = arith.constant 0 : index
    %29 = vector.load %arg5[%c32, %c0_21] : memref<192x128xf32, #tpu.memory_space<vmem>>, vector<1x64xf32>
    %30 = vector.broadcast %29 : vector<1x64xf32> to vector<16x64xf32>
    %31 = arith.addf %28, %30 : vector<16x64xf32>
    %32 = arith.mulf %31, %31 : vector<16x64xf32>
    %33 = tpu.concatenate %31, %32 in 1 : vector<16x64xf32>, vector<16x64xf32> -> vector<16x128xf32>
    %cst_22 = arith.constant dense<0.000000e+00> : vector<16x128xf32>
    %34 = tpu.matmul %0, %33, %cst_22 {dimension_numbers = #tpu.dot_dimension_numbers<[1], [0], [0], [1], [0, 0, 1, 1], [], []>} : vector<16x16xf32>, vector<16x128xf32>, vector<16x128xf32> -> vector<16x128xf32>
    %35 = vector.extract_strided_slice %34 {offsets = [0, 0], sizes = [16, 32], strides = [1, 1]} : vector<16x128xf32> to vector<16x32xf32>
    %cst_23 = arith.constant dense<0.000000e+00> : vector<16xf32>
    %36 = vector.multi_reduction <add>, %35, %cst_23 [1] : vector<16x32xf32> to vector<16xf32>
    %37 = vector.shape_cast %36 : vector<16xf32> to vector<16x1xf32>
    %cst_24 = arith.constant 3.200000e+01 : f32
    %38 = vector.broadcast %cst_24 : f32 to vector<16x1xf32>
    %39 = arith.divf %37, %38 : vector<16x1xf32>
    %40 = vector.extract_strided_slice %34 {offsets = [0, 64], sizes = [16, 32], strides = [1, 1]} : vector<16x128xf32> to vector<16x32xf32>
    %cst_25 = arith.constant dense<0.000000e+00> : vector<16xf32>
    %41 = vector.multi_reduction <add>, %40, %cst_25 [1] : vector<16x32xf32> to vector<16xf32>
    %42 = vector.shape_cast %41 : vector<16xf32> to vector<16x1xf32>
    %cst_26 = arith.constant 3.200000e+01 : f32
    %43 = vector.broadcast %cst_26 : f32 to vector<16x1xf32>
    %44 = arith.divf %42, %43 : vector<16x1xf32>
    %45 = arith.mulf %39, %39 : vector<16x1xf32>
    %46 = arith.subf %44, %45 : vector<16x1xf32>
    %cst_27 = arith.constant 0.000000e+00 : f32
    %47 = vector.broadcast %cst_27 : f32 to vector<16x1xf32>
    %48 = arith.maximumf %46, %47 : vector<16x1xf32>
    %49 = vector.extract_strided_slice %31 {offsets = [0, 0], sizes = [16, 32], strides = [1, 1]} : vector<16x64xf32> to vector<16x32xf32>
    %50 = vector.broadcast %39 : vector<16x1xf32> to vector<16x32xf32>
    %51 = arith.subf %49, %50 : vector<16x32xf32>
    %cst_28 = arith.constant 9.99999974E-6 : f32
    %52 = vector.broadcast %cst_28 : f32 to vector<16x1xf32>
    %53 = arith.addf %48, %52 : vector<16x1xf32>
    %54 = math.rsqrt %53 : vector<16x1xf32>
    %55 = vector.broadcast %54 : vector<16x1xf32> to vector<16x32xf32>
    %56 = arith.mulf %51, %55 : vector<16x32xf32>
    %57 = vector.extract_strided_slice %34 {offsets = [0, 32], sizes = [16, 32], strides = [1, 1]} : vector<16x128xf32> to vector<16x32xf32>
    %cst_29 = arith.constant dense<0.000000e+00> : vector<16xf32>
    %58 = vector.multi_reduction <add>, %57, %cst_29 [1] : vector<16x32xf32> to vector<16xf32>
    %59 = vector.shape_cast %58 : vector<16xf32> to vector<16x1xf32>
    %cst_30 = arith.constant 3.200000e+01 : f32
    %60 = vector.broadcast %cst_30 : f32 to vector<16x1xf32>
    %61 = arith.divf %59, %60 : vector<16x1xf32>
    %62 = vector.extract_strided_slice %34 {offsets = [0, 96], sizes = [16, 32], strides = [1, 1]} : vector<16x128xf32> to vector<16x32xf32>
    %cst_31 = arith.constant dense<0.000000e+00> : vector<16xf32>
    %63 = vector.multi_reduction <add>, %62, %cst_31 [1] : vector<16x32xf32> to vector<16xf32>
    %64 = vector.shape_cast %63 : vector<16xf32> to vector<16x1xf32>
    %cst_32 = arith.constant 3.200000e+01 : f32
    %65 = vector.broadcast %cst_32 : f32 to vector<16x1xf32>
    %66 = arith.divf %64, %65 : vector<16x1xf32>
    %67 = arith.mulf %61, %61 : vector<16x1xf32>
    %68 = arith.subf %66, %67 : vector<16x1xf32>
    %cst_33 = arith.constant 0.000000e+00 : f32
    %69 = vector.broadcast %cst_33 : f32 to vector<16x1xf32>
    %70 = arith.maximumf %68, %69 : vector<16x1xf32>
    %71 = vector.extract_strided_slice %31 {offsets = [0, 32], sizes = [16, 32], strides = [1, 1]} : vector<16x64xf32> to vector<16x32xf32>
    %72 = vector.broadcast %61 : vector<16x1xf32> to vector<16x32xf32>
    %73 = arith.subf %71, %72 : vector<16x32xf32>
    %cst_34 = arith.constant 9.99999974E-6 : f32
    %74 = vector.broadcast %cst_34 : f32 to vector<16x1xf32>
    %75 = arith.addf %70, %74 : vector<16x1xf32>
    %76 = math.rsqrt %75 : vector<16x1xf32>
    %77 = vector.broadcast %76 : vector<16x1xf32> to vector<16x32xf32>
    %78 = arith.mulf %73, %77 : vector<16x32xf32>
    %79 = tpu.concatenate %56, %78 in 1 : vector<16x32xf32>, vector<16x32xf32> -> vector<16x64xf32>
    %80 = vector.extract_strided_slice %22 {offsets = [0, 0], sizes = [16, 64], strides = [1, 1]} : vector<16x128xf32> to vector<16x64xf32>
    %c40_35 = arith.constant 40 : index
    %c0_36 = arith.constant 0 : index
    %81 = vector.load %arg5[%c40_35, %c0_36] : memref<192x128xf32, #tpu.memory_space<vmem>>, vector<16x64xf32>
    %82 = arith.mulf %79, %81 : vector<16x64xf32>
    %83 = arith.addf %80, %82 : vector<16x64xf32>
    %c56 = arith.constant 56 : index
    %c0_37 = arith.constant 0 : index
    %84 = vector.load %arg5[%c56, %c0_37] : memref<192x128xf32, #tpu.memory_space<vmem>>, vector<16x64xf32>
    %85 = arith.addf %83, %84 : vector<16x64xf32>
    %c104 = arith.constant 104 : index
    %c0_38 = arith.constant 0 : index
    %86 = vector.load %arg4[%c104, %c0_38] : memref<256x128xbf16, #tpu.memory_space<vmem>>, vector<16x16xbf16>
    %cst_39 = arith.constant dense<0.000000e+00> : vector<16x64xf32>
    %87 = tpu.matmul %86, %85, %cst_39 {dimension_numbers = #tpu.dot_dimension_numbers<[1], [0], [0], [1], [0, 0, 1, 1], [], []>} : vector<16x16xbf16>, vector<16x64xf32>, vector<16x64xf32> -> vector<16x64xf32>
    %c72 = arith.constant 72 : index
    %c0_40 = arith.constant 0 : index
    %88 = vector.load %arg5[%c72, %c0_40] : memref<192x128xf32, #tpu.memory_space<vmem>>, vector<16x1xf32>
    %89 = vector.broadcast %88 : vector<16x1xf32> to vector<16x64xf32>
    %90 = arith.addf %87, %89 : vector<16x64xf32>
    %cst_41 = arith.constant 0.000000e+00 : f32
    %91 = vector.broadcast %cst_41 : f32 to vector<16x64xf32>
    %92 = arith.maximumf %90, %91 : vector<16x64xf32>
    %93 = arith.addf %85, %92 : vector<16x64xf32>
    %94 = arith.mulf %93, %93 : vector<16x64xf32>
    %95 = tpu.concatenate %93, %94 in 1 : vector<16x64xf32>, vector<16x64xf32> -> vector<16x128xf32>
    %cst_42 = arith.constant dense<0.000000e+00> : vector<16x128xf32>
    %96 = tpu.matmul %0, %95, %cst_42 {dimension_numbers = #tpu.dot_dimension_numbers<[1], [0], [0], [1], [0, 0, 1, 1], [], []>} : vector<16x16xf32>, vector<16x128xf32>, vector<16x128xf32> -> vector<16x128xf32>
    %97 = vector.extract_strided_slice %96 {offsets = [0, 0], sizes = [16, 64], strides = [1, 1]} : vector<16x128xf32> to vector<16x64xf32>
    %cst_43 = arith.constant dense<0.000000e+00> : vector<16xf32>
    %98 = vector.multi_reduction <add>, %97, %cst_43 [1] : vector<16x64xf32> to vector<16xf32>
    %99 = vector.shape_cast %98 : vector<16xf32> to vector<16x1xf32>
    %cst_44 = arith.constant 6.400000e+01 : f32
    %100 = vector.broadcast %cst_44 : f32 to vector<16x1xf32>
    %101 = arith.divf %99, %100 : vector<16x1xf32>
    %102 = vector.extract_strided_slice %96 {offsets = [0, 64], sizes = [16, 64], strides = [1, 1]} : vector<16x128xf32> to vector<16x64xf32>
    %cst_45 = arith.constant dense<0.000000e+00> : vector<16xf32>
    %103 = vector.multi_reduction <add>, %102, %cst_45 [1] : vector<16x64xf32> to vector<16xf32>
    %104 = vector.shape_cast %103 : vector<16xf32> to vector<16x1xf32>
    %cst_46 = arith.constant 6.400000e+01 : f32
    %105 = vector.broadcast %cst_46 : f32 to vector<16x1xf32>
    %106 = arith.divf %104, %105 : vector<16x1xf32>
    %107 = arith.mulf %101, %101 : vector<16x1xf32>
    %108 = arith.subf %106, %107 : vector<16x1xf32>
    %cst_47 = arith.constant 0.000000e+00 : f32
    %109 = vector.broadcast %cst_47 : f32 to vector<16x1xf32>
    %110 = arith.maximumf %108, %109 : vector<16x1xf32>
    %111 = vector.broadcast %101 : vector<16x1xf32> to vector<16x64xf32>
    %112 = arith.subf %93, %111 : vector<16x64xf32>
    %cst_48 = arith.constant 9.99999974E-6 : f32
    %113 = vector.broadcast %cst_48 : f32 to vector<16x1xf32>
    %114 = arith.addf %110, %113 : vector<16x1xf32>
    %115 = math.rsqrt %114 : vector<16x1xf32>
    %116 = vector.broadcast %115 : vector<16x1xf32> to vector<16x64xf32>
    %117 = arith.mulf %112, %116 : vector<16x64xf32>
    %c88 = arith.constant 88 : index
    %c0_49 = arith.constant 0 : index
    %118 = vector.load %arg5[%c88, %c0_49] : memref<192x128xf32, #tpu.memory_space<vmem>>, vector<16x64xf32>
    %119 = arith.mulf %117, %118 : vector<16x64xf32>
    %c104_50 = arith.constant 104 : index
    %c0_51 = arith.constant 0 : index
    %120 = vector.load %arg5[%c104_50, %c0_51] : memref<192x128xf32, #tpu.memory_space<vmem>>, vector<16x64xf32>
    %121 = arith.addf %119, %120 : vector<16x64xf32>
    %122 = tpu.concatenate %121, %3 in 1 : vector<16x64xf32>, vector<16x2xf32> -> vector<16x66xf32>
    %c120 = arith.constant 120 : index
    %c0_52 = arith.constant 0 : index
    %123 = vector.load %arg4[%c120, %c0_52] : memref<256x128xbf16, #tpu.memory_space<vmem>>, vector<66x64xbf16>
    %124 = arith.truncf %122 : vector<16x66xf32> to vector<16x66xbf16>
    %cst_53 = arith.constant dense<0.000000e+00> : vector<16x64xf32>
    %125 = tpu.matmul %124, %123, %cst_53 {dimension_numbers = #tpu.dot_dimension_numbers<[1], [0], [0], [1], [0, 0, 1, 1], [], []>} : vector<16x66xbf16>, vector<66x64xbf16>, vector<16x64xf32> -> vector<16x64xf32>
    %c120_54 = arith.constant 120 : index
    %c0_55 = arith.constant 0 : index
    %126 = vector.load %arg5[%c120_54, %c0_55] : memref<192x128xf32, #tpu.memory_space<vmem>>, vector<1x64xf32>
    %127 = vector.broadcast %126 : vector<1x64xf32> to vector<16x64xf32>
    %128 = arith.addf %125, %127 : vector<16x64xf32>
    %129 = vector.extract_strided_slice %128 {offsets = [0, 32], sizes = [16, 32], strides = [1, 1]} : vector<16x64xf32> to vector<16x32xf32>
    %cst_56 = arith.constant 0.000000e+00 : f32
    %130 = vector.broadcast %cst_56 : f32 to vector<16x32xf32>
    %131 = arith.maximumf %129, %130 : vector<16x32xf32>
    %c192 = arith.constant 192 : index
    %c0_57 = arith.constant 0 : index
    %132 = vector.load %arg4[%c192, %c0_57] : memref<256x128xbf16, #tpu.memory_space<vmem>>, vector<32x32xbf16>
    %133 = arith.truncf %131 : vector<16x32xf32> to vector<16x32xbf16>
    %cst_58 = arith.constant dense<0.000000e+00> : vector<16x32xf32>
    %134 = tpu.matmul %133, %132, %cst_58 {dimension_numbers = #tpu.dot_dimension_numbers<[1], [0], [0], [1], [0, 0, 1, 1], [], []>} : vector<16x32xbf16>, vector<32x32xbf16>, vector<16x32xf32> -> vector<16x32xf32>
    %c128 = arith.constant 128 : index
    %c0_59 = arith.constant 0 : index
    %135 = vector.load %arg5[%c128, %c0_59] : memref<192x128xf32, #tpu.memory_space<vmem>>, vector<1x32xf32>
    %136 = vector.broadcast %135 : vector<1x32xf32> to vector<16x32xf32>
    %137 = arith.addf %134, %136 : vector<16x32xf32>
    %138 = arith.mulf %137, %137 : vector<16x32xf32>
    %139 = tpu.concatenate %137, %138 in 1 : vector<16x32xf32>, vector<16x32xf32> -> vector<16x64xf32>
    %cst_60 = arith.constant dense<0.000000e+00> : vector<16x64xf32>
    %140 = tpu.matmul %0, %139, %cst_60 {dimension_numbers = #tpu.dot_dimension_numbers<[1], [0], [0], [1], [0, 0, 1, 1], [], []>} : vector<16x16xf32>, vector<16x64xf32>, vector<16x64xf32> -> vector<16x64xf32>
    %141 = vector.extract_strided_slice %128 {offsets = [0, 0], sizes = [16, 32], strides = [1, 1]} : vector<16x64xf32> to vector<16x32xf32>
    %142 = vector.extract_strided_slice %140 {offsets = [0, 0], sizes = [16, 32], strides = [1, 1]} : vector<16x64xf32> to vector<16x32xf32>
    %cst_61 = arith.constant dense<0.000000e+00> : vector<16xf32>
    %143 = vector.multi_reduction <add>, %142, %cst_61 [1] : vector<16x32xf32> to vector<16xf32>
    %144 = vector.shape_cast %143 : vector<16xf32> to vector<16x1xf32>
    %cst_62 = arith.constant 3.200000e+01 : f32
    %145 = vector.broadcast %cst_62 : f32 to vector<16x1xf32>
    %146 = arith.divf %144, %145 : vector<16x1xf32>
    %147 = vector.extract_strided_slice %140 {offsets = [0, 32], sizes = [16, 32], strides = [1, 1]} : vector<16x64xf32> to vector<16x32xf32>
    %cst_63 = arith.constant dense<0.000000e+00> : vector<16xf32>
    %148 = vector.multi_reduction <add>, %147, %cst_63 [1] : vector<16x32xf32> to vector<16xf32>
    %149 = vector.shape_cast %148 : vector<16xf32> to vector<16x1xf32>
    %cst_64 = arith.constant 3.200000e+01 : f32
    %150 = vector.broadcast %cst_64 : f32 to vector<16x1xf32>
    %151 = arith.divf %149, %150 : vector<16x1xf32>
    %152 = arith.mulf %146, %146 : vector<16x1xf32>
    %153 = arith.subf %151, %152 : vector<16x1xf32>
    %cst_65 = arith.constant 0.000000e+00 : f32
    %154 = vector.broadcast %cst_65 : f32 to vector<16x1xf32>
    %155 = arith.maximumf %153, %154 : vector<16x1xf32>
    %156 = vector.broadcast %146 : vector<16x1xf32> to vector<16x32xf32>
    %157 = arith.subf %137, %156 : vector<16x32xf32>
    %cst_66 = arith.constant 9.99999974E-6 : f32
    %158 = vector.broadcast %cst_66 : f32 to vector<16x1xf32>
    %159 = arith.addf %155, %158 : vector<16x1xf32>
    %160 = math.rsqrt %159 : vector<16x1xf32>
    %161 = vector.broadcast %160 : vector<16x1xf32> to vector<16x32xf32>
    %162 = arith.mulf %157, %161 : vector<16x32xf32>
    %c136 = arith.constant 136 : index
    %c0_67 = arith.constant 0 : index
    %163 = vector.load %arg5[%c136, %c0_67] : memref<192x128xf32, #tpu.memory_space<vmem>>, vector<16x32xf32>
    %164 = arith.mulf %162, %163 : vector<16x32xf32>
    %165 = arith.addf %141, %164 : vector<16x32xf32>
    %c152 = arith.constant 152 : index
    %c0_68 = arith.constant 0 : index
    %166 = vector.load %arg5[%c152, %c0_68] : memref<192x128xf32, #tpu.memory_space<vmem>>, vector<16x32xf32>
    %167 = arith.addf %165, %166 : vector<16x32xf32>
    %c224 = arith.constant 224 : index
    %c0_69 = arith.constant 0 : index
    %168 = vector.load %arg4[%c224, %c0_69] : memref<256x128xbf16, #tpu.memory_space<vmem>>, vector<32x8xbf16>
    %169 = arith.truncf %167 : vector<16x32xf32> to vector<16x32xbf16>
    %cst_70 = arith.constant dense<0.000000e+00> : vector<16x8xf32>
    %170 = tpu.matmul %169, %168, %cst_70 {dimension_numbers = #tpu.dot_dimension_numbers<[1], [0], [0], [1], [0, 0, 1, 1], [], []>} : vector<16x32xbf16>, vector<32x8xbf16>, vector<16x8xf32> -> vector<16x8xf32>
    %c168 = arith.constant 168 : index
    %c0_71 = arith.constant 0 : index
    %171 = vector.load %arg5[%c168, %c0_71] : memref<192x128xf32, #tpu.memory_space<vmem>>, vector<1x8xf32>
    %172 = vector.broadcast %171 : vector<1x8xf32> to vector<16x8xf32>
    %173 = arith.addf %170, %172 : vector<16x8xf32>
    %174 = vector.extract_strided_slice %173 {offsets = [0, 0], sizes = [16, 4], strides = [1, 1]} : vector<16x8xf32> to vector<16x4xf32>
    %c0_72 = arith.constant 0 : index
    %c0_73 = arith.constant 0 : index
    %175 = vector.load %arg6[%c0_72, %c0_73] : memref<16x11xf32, #tpu.memory_space<vmem>>, vector<16x4xf32>
    tpu.vector_store %arg6[%c0_72, %c0_73], %174 {strides = array<i32>} : memref<16x11xf32, #tpu.memory_space<vmem>>, vector<16x4xf32>,
    %176 = vector.extract_strided_slice %173 {offsets = [0, 4], sizes = [16, 4], strides = [1, 1]} : vector<16x8xf32> to vector<16x4xf32>
    %cst_74 = arith.constant 2.000000e+01 : f32
    %177 = vector.broadcast %cst_74 : f32 to vector<16x4xf32>
    %178 = arith.cmpf ogt, %176, %177 : vector<16x4xf32>
    %cst_75 = arith.constant 2.000000e+01 : f32
    %179 = vector.broadcast %cst_75 : f32 to vector<16x4xf32>
    %180 = arith.minimumf %176, %179 : vector<16x4xf32>
    %181 = math.exp %180 : vector<16x4xf32>
    %182 = math.log1p %181 : vector<16x4xf32>
    %183 = arith.select %178, %176, %182 : vector<16x4xi1>, vector<16x4xf32>
    %c0_76 = arith.constant 0 : index
    %c4 = arith.constant 4 : index
    %184 = vector.load %arg6[%c0_76, %c4] : memref<16x11xf32, #tpu.memory_space<vmem>>, vector<16x4xf32>
    tpu.vector_store %arg6[%c0_76, %c4], %183 {strides = array<i32>} : memref<16x11xf32, #tpu.memory_space<vmem>>, vector<16x4xf32>,
    %c0_77 = arith.constant 0 : index
    %c8_78 = arith.constant 8 : index
    %185 = vector.load %arg6[%c0_77, %c8_78] : memref<16x11xf32, #tpu.memory_space<vmem>>, vector<16x3xf32>
    tpu.vector_store %arg6[%c0_77, %c8_78], %10 {strides = array<i32>} : memref<16x11xf32, #tpu.memory_space<vmem>>, vector<16x3xf32>,
    return
  }
  func.func @transform_0(%arg0: i32) -> (i32, i32) {
    %c0_i32 = arith.constant 0 : i32
    %c0_i32_0 = arith.constant 0 : i32
    return %arg0, %c0_i32 : i32, i32
  }
  func.func @transform_1(%arg0: i32) -> (i32, i32) {
    %c0_i32 = arith.constant 0 : i32
    %c0_i32_0 = arith.constant 0 : i32
    return %arg0, %c0_i32 : i32, i32
  }
  func.func @transform_2(%arg0: i32) -> (i32, i32) {
    %c0_i32 = arith.constant 0 : i32
    %c0_i32_0 = arith.constant 0 : i32
    return %arg0, %c0_i32 : i32, i32
  }
  func.func @transform_3(%arg0: i32) -> (i32, i32) {
    %c0_i32 = arith.constant 0 : i32
    %c0_i32_0 = arith.constant 0 : i32
    %c0_i32_1 = arith.constant 0 : i32
    return %c0_i32, %c0_i32_0 : i32, i32
  }
  func.func @transform_4(%arg0: i32) -> (i32, i32) {
    %c0_i32 = arith.constant 0 : i32
    %c0_i32_0 = arith.constant 0 : i32
    %c0_i32_1 = arith.constant 0 : i32
    return %c0_i32, %c0_i32_0 : i32, i32
  }
  func.func @transform_5(%arg0: i32) -> (i32, i32) {
    %c0_i32 = arith.constant 0 : i32
    %c0_i32_0 = arith.constant 0 : i32
    return %arg0, %c0_i32 : i32, i32
  }
}

</mosaic_0001>

<llo_original>
// kernel: tpu_custom_call.1
$region0: #{tpu_custom_call.1}
  #allocation0 [shape = 'u32[]', space=smem, size = 0x4, offset = 0x4, fixed_abs, tag = 'smem constant byte address 0x4 - core index']
  #allocation1 [shape = 'u32[72,128]{1,0:T(1,128)}', space=vmem, size = 0x9000, scoped, tag = 'internal scratch']
  %s0 = inlined_call_operand.vmem [shape: f32[32,7], index: 0, kind: input, shape index: {}]
  %s1 = inlined_call_operand.vmem [shape: f32[16,3], index: 1, kind: input, shape index: {}]
  %s2 = inlined_call_operand.vmem [shape: f32[16,2], index: 2, kind: input, shape index: {}]
  %s3 = inlined_call_operand.hbm [shape: bf16[256,128], index: 3, kind: input, shape index: {}]
  %s4 = inlined_call_operand.hbm [shape: f32[192,128], index: 4, kind: input, shape index: {}]
  %s5 = inlined_call_operand.hbm [shape: f32[16,11], index: 5, kind: output, shape index: {}]
  %s6 = sld [smem:[#allocation0]]
  $region38: #{tpu_custom_call.1} parent=0
    _
  %s8 = ssub.s32 1, %s6
  %s9 = scalar_select 0, %s8, %s6
  $region1: #{tpu_custom_call.1} parent=0
    #allocation2 [shape = 'u8[65536]{0}', space=vmem, size = 0x10000, scoped, tag = 'input window, operand 3, single buffered']
    #allocation3 [shape = 's32[1]{0}', space=sflag, size = 0x4, scoped, tag = 'scoped memory for tpu_custom_call.1']
    #allocation4 [shape = 's32[1]{0}', space=sflag, size = 0x4, scoped, tag = 'scoped memory for tpu_custom_call.1']
    #allocation5 [shape = 'u8[98304]{0}', space=vmem, size = 0x18000, scoped, tag = 'input window, operand 4, single buffered']
    #allocation6 [shape = 's32[1]{0}', space=sflag, size = 0x4, scoped, tag = 'scoped memory for tpu_custom_call.1']
    #allocation7 [shape = 'u8[8192]{0}', space=vmem, size = 0x2000, scoped, tag = 'output window, operand 0, single buffered']
    %10 = vsyncpa [#allocation3], 0
    %11 = vsyncpa [#allocation6], 0
    %12 = vsyncpa [#allocation4], 0
    // Predicated region
    $region2: #{tpu_custom_call.1} parent=1 // pred_check
      _
    $region3: #{tpu_custom_call.1} parent=1 // pred_check_branch
      %14 = sbr.rel (0) target = $region5
    $region4: #{tpu_custom_call.1} parent=1 // pred_region
      _
    $region5: #{tpu_custom_call.1} parent=1 // pred_fallthru
      _
    // Predicated region
    $region6: #{tpu_custom_call.1} parent=1 // pred_check
      _
    $region7: #{tpu_custom_call.1} parent=1 // pred_check_branch
      %16 = sbr.rel (0) target = $region9
    $region8: #{tpu_custom_call.1} parent=1 // pred_region
      _
    $region9: #{tpu_custom_call.1} parent=1 // pred_fallthru
      _
    // Predicated region
    $region10: #{tpu_custom_call.1} parent=1 // pred_check
      _
    $region11: #{tpu_custom_call.1} parent=1 // pred_check_branch
      %18 = sbr.rel (0) target = $region13
    $region12: #{tpu_custom_call.1} parent=1 // pred_region
      _
    $region13: #{tpu_custom_call.1} parent=1 // pred_fallthru
      _
    // Predicated region
    $region14: #{tpu_custom_call.1} parent=1 // pred_check
      _
    $region15: #{tpu_custom_call.1} parent=1 // pred_check_branch
      %20 = sbr.rel (0) target = $region17
    $region16: #{tpu_custom_call.1} parent=1 // pred_region
      %22 = vsyncadd [#allocation3], 0
      %s23 = sshll.u32 %s3, 4
      %s24 = int_to_ptr.hbm [resolvable:$true] %s23
      %s25 = sshll.u32 [#allocation2], 4
      %s26 = int_to_ptr.vmem [resolvable:$true] %s25
      %31 = dma.hbm_to_vmem [thread:$0]  %s24, 2048, %s26, [#allocation3], 64, 64, 4
    $region17: #{tpu_custom_call.1} parent=1 // pred_fallthru
      _
    // Predicated region
    $region18: #{tpu_custom_call.1} parent=1 // pred_check
      _
    $region19: #{tpu_custom_call.1} parent=1 // pred_check_branch
      %33 = sbr.rel (0) target = $region21
    $region20: #{tpu_custom_call.1} parent=1 // pred_region
      %35 = vsyncadd [#allocation6], 0
      %s36 = sshll.u32 %s4, 4
      %s37 = int_to_ptr.hbm [resolvable:$true] %s36
      %s38 = sshll.u32 [#allocation5], 4
      %s39 = int_to_ptr.vmem [resolvable:$true] %s38
      %44 = dma.hbm_to_vmem [thread:$0]  %s37, 3072, %s39, [#allocation6], 128, 128, 8
    $region21: #{tpu_custom_call.1} parent=1 // pred_fallthru
      _
    // Predicated region
    $region22: #{tpu_custom_call.1} parent=1 // pred_check
      _
    $region23: #{tpu_custom_call.1} parent=1 // pred_check_branch
      %46 = sbr.rel (0) target = $region25
    $region24: #{tpu_custom_call.1} parent=1 // pred_region
      %48 = dma.done [#allocation3], 2048
    $region25: #{tpu_custom_call.1} parent=1 // pred_fallthru
      _
    // Predicated region
    $region26: #{tpu_custom_call.1} parent=1 // pred_check
      _
    $region27: #{tpu_custom_call.1} parent=1 // pred_check_branch
      %50 = sbr.rel (0) target = $region29
    $region28: #{tpu_custom_call.1} parent=1 // pred_region
      %52 = dma.done [#allocation6], 3072
    $region29: #{tpu_custom_call.1} parent=1 // pred_fallthru
      _
    %v54 = vld [vmem:[#allocation5 + $0xb0] sm:$0xff]
    %v55 = vld [vmem:[#allocation5 + $0xb8] sm:$0xff]
    %v56 = vld [vmem:[%s0] sm:$0xff]
    %v57 = vld [vmem:[%s0 + $0x8] sm:$0xff]
    %v58 = vld [vmem:[%s0 + $0x10] sm:$0xff]
    %v59 = vld [vmem:[%s0 + $0x18] sm:$0xff]
    %v60 = vld [vmem:[%s1] sm:$0xff]
    %v61 = vld [vmem:[%s1 + $0x8] sm:$0xff]
    %v62 = vld [vmem:[%s2] sm:$0xff]
    %v63 = vld [vmem:[%s2 + $0x8] sm:$0xff]
    %v64 = vld [vmem:[#allocation2] sm:$0x3]
    %v65 = vpack.c.bf16 %v61, %v60
    %vm66 = vcmask 23552
    %v68 = vsel %vm66, %v65, 0
    %vm70 = vcmask 1040384
    %vm71 = vcmask 1041408
    %v72 = vsel %vm70, 4294967295, 65535
    %v73 = vsel %vm71, %v72, 0
    %v75 = vand.u32 %v64, %v73
    %77 = vmatpush.bf16.msra.mxu0 0
    %78 = vmatpush.bf16.msra.mxu0 0
    %79 = vmatpush.bf16.msra.mxu0 0
    %80 = vmatpush.bf16.msra.mxu0 0
    %81 = vmatpush.bf16.msra.mxu0 0
    %82 = vmatpush.bf16.msra.mxu0 0
    %83 = vmatpush.bf16.msra.mxu0 0
    %84 = vmatpush.bf16.msra.mxu0 %v75
    %85 = vmatmul.bf16.gmra.mxu0 %v68
    %v86 = vpop.f32.mrf.mxu0
    %v87 = vadd.f32 0.0, %v86
    %v88 = vpop.f32.mrf.mxu0
    %v89 = vadd.f32 0.0, %v88
    %90 = vdwg.mxu0
    %v91 = vadd.f32 %v60, %v87
    %v92 = vadd.f32 %v61, %v89
    %v93 = vld [vmem:[#allocation5] sm:$0x1]
    %v94 = vperm.slane %v93, 0
    %v95 = vadd.f32 %v91, %v94
    %v96 = vadd.f32 %v92, %v94
    %v97 = vld [vmem:[#allocation2 + $0x4] sm:$0xf]
    %v98 = vld [vmem:[#allocation2 + $0x8] sm:$0xf]
    %v99 = vld [vmem:[#allocation5 + $0x8] sm:$0xff]
    %v100 = vld [vmem:[#allocation5 + $0x10] sm:$0xff]
    %102 = vset.pattern.permute.xlu0 0
    %103 = vperm.xlu0 %102, %v99
    %v104 = vpop.permute.xlu0 %103
    %107 = vset.pattern.permute.xlu0 0
    %108 = vperm.xlu0 %107, %v100
    %v109 = vpop.permute.xlu0 %108
    %v113 = vunpack.c.l.b16 %v97
    %v114 = vunpack.c.l.b16 %v98
    %v115 = vpack.c.b16 %v114, %v113
    %vm116 = vcmask 261120
    %v118 = vsel %vm116, %v115, 0
    %120 = vmatpush.msra.mxu0 0.0
    %121 = vmatpush.msra.mxu0 0.0
    %122 = vmatpush.msra.mxu0 0.0
    %123 = vmatpush.msra.mxu0 0.0
    %124 = vmatpush.msra.mxu0 0.0
    %125 = vmatpush.msra.mxu0 0.0
    %126 = vmatpush.msra.mxu0 0.0
    %127 = vmatpush.msra.mxu0 0.0
    %128 = vmatpush.msra.mxu0 0.0
    %129 = vmatpush.msra.mxu0 0.0
    %130 = vmatpush.msra.mxu0 0.0
    %131 = vmatpush.msra.mxu0 0.0
    %132 = vmatpush.msra.mxu0 %v59
    %133 = vmatpush.msra.mxu0 %v58
    %134 = vmatpush.msra.mxu0 %v57
    %135 = vmatpush.msra.mxu0 %v56
    %136 = vmatmul.bf16.gmra.mxu0 %v118
    %v137 = vpop.f32.mrf.mxu0
    %v138 = vadd.f32 %v104, %v137
    %v139 = vpop.f32.mrf.mxu0
    %v140 = vadd.f32 %v109, %v139
    %141 = vdwg.mxu0
    %144 = vrot.lane.b32.xlu0 %v95, 7
    %v145 = vpop.permute.xlu0 %144
    %146 = vrot.lane.b32.xlu0 %v96, 7
    %v147 = vpop.permute.xlu0 %146
    %152 = vrot.lane.b32.xlu0 %v62, 10
    %v153 = vpop.permute.xlu0 %152
    %154 = vrot.lane.b32.xlu0 %v63, 10
    %v155 = vpop.permute.xlu0 %154
    %vm158 = vcmask 56320
    %v159 = vsel %vm158, %v138, %v145
    %v160 = vsel %vm158, %v140, %v147
    %vm161 = vcmask 80896
    %v162 = vsel %vm161, %v159, %v153
    %v163 = vsel %vm161, %v160, %v155
    %v164 = vld [vmem:[#allocation2 + $0xc] sm:$0xf]
    %v165 = vld [vmem:[#allocation2 + $0x10] sm:$0x3]
    %v166 = vpack.c.bf16 %v163, %v162
    %v167 = vld [vmem:[#allocation5 + $0x18] sm:$0x1]
    %v168 = vperm.slane %v167, 0
    %v171 = vunpack.c.l.b16 %v164
    %v172 = vunpack.c.l.b16 %v165
    %v173 = vpack.c.b16 %v172, %v171
    %vm174 = vcmask 97280
    %v176 = vsel %vm174, %v166, 0
    %vm178 = vcmask 1045504
    %v180 = vsel %vm178, %v173, 0
    %182 = vmatpush.bf16.msra.mxu0 0
    %183 = vmatpush.bf16.msra.mxu0 0
    %184 = vmatpush.bf16.msra.mxu0 0
    %185 = vmatpush.bf16.msra.mxu0 0
    %186 = vmatpush.bf16.msra.mxu0 0
    %187 = vmatpush.bf16.msra.mxu0 0
    %188 = vmatpush.bf16.msra.mxu0 0
    %189 = vmatpush.bf16.msra.mxu0 %v180
    %190 = vmatmul.bf16.gmra.mxu0 %v176
    %v191 = vpop.f32.mrf.mxu0
    %v192 = vadd.f32 %v168, %v191
    %v193 = vpop.f32.mrf.mxu0
    %v194 = vadd.f32 %v168, %v193
    %195 = vdwg.mxu0
    %v196 = vmax.f32 %v192, 0.0
    %v197 = vmax.f32 %v194, 0.0
    %v198 = vld [vmem:[#allocation2 + $0x14] sm:$0xf]
    %v199 = vld [vmem:[#allocation2 + $0x18] sm:$0xf]
    %v200 = vld [vmem:[#allocation2 + $0x1c] sm:$0xf]
    %v201 = vld [vmem:[#allocation2 + $0x20] sm:$0xf]
    %v202 = vld [vmem:[#allocation2 + $0x24] sm:$0xf]
    %v203 = vld [vmem:[#allocation2 + $0x28] sm:$0xf]
    %v204 = vld [vmem:[#allocation2 + $0x2c] sm:$0xf]
    %v205 = vld [vmem:[#allocation2 + $0x30] sm:$0xf]
    %v206 = vpack.c.bf16 %v197, %v196
    %v207 = vld [vmem:[#allocation5 + $0x20] sm:$0x1]
    %v208 = vperm.slane %v207, 0
    %210 = vrot.lane.b32.xlu0 %v206, 64
    %v211 = vpop.permute.xlu0 %210
    %v220 = vunpack.c.l.b16 %v198
    %v221 = vunpack.c.l.b16 %v199
    %v222 = vunpack.c.l.b16 %v200
    %v223 = vunpack.c.l.b16 %v201
    %v224 = vunpack.c.l.b16 %v202
    %v225 = vunpack.c.l.b16 %v203
    %v226 = vunpack.c.l.b16 %v204
    %v227 = vunpack.c.l.b16 %v205
    %v228 = vpack.c.b16 %v221, %v220
    %v229 = vpack.c.b16 %v223, %v222
    %v230 = vpack.c.b16 %v225, %v224
    %v231 = vpack.c.b16 %v227, %v226
    %vm236 = vcmask 523264
    %v238 = vsel %vm236, %v211, 0
    %240 = vmatpush.bf16.msra.mxu0 0
    %241 = vmatpush.bf16.msra.mxu0 0
    %242 = vmatpush.bf16.msra.mxu0 0
    %243 = vmatpush.bf16.msra.mxu0 0
    %244 = vmatpush.bf16.msra.mxu0 %v231
    %245 = vmatpush.bf16.msra.mxu0 %v230
    %246 = vmatpush.bf16.msra.mxu0 %v229
    %247 = vmatpush.bf16.msra.mxu0 %v228
    %248 = vmatmul.bf16.gmra.mxu0 %v238
    %v249 = vpop.f32.mrf.mxu0
    %v250 = vadd.f32 %v208, %v249
    %v251 = vpop.f32.mrf.mxu0
    %v252 = vadd.f32 %v208, %v251
    %253 = vdwg.mxu0
    %v254 = vmul.f32 %v250, %v250
    %v255 = vmul.f32 %v252, %v252
    %258 = vrot.lane.b32.xlu0 %v254, 64
    %v259 = vpop.permute.xlu0 %258
    %260 = vrot.lane.b32.xlu0 %v255, 64
    %v261 = vpop.permute.xlu0 %260
    %v264 = vsel %vm236, %v250, %v259
    %v265 = vsel %vm236, %v252, %v261
    %vm266 = vcmask 130048
    %v268 = vsel %vm266, %v54, 0
    %v271 = vsel %vm266, %v55, 0
    %273 = vmatpush.msra.mxu0 0.0
    %274 = vmatpush.msra.mxu0 0.0
    %275 = vmatpush.msra.mxu0 0.0
    %276 = vmatpush.msra.mxu0 0.0
    %277 = vmatpush.msra.mxu0 0.0
    %278 = vmatpush.msra.mxu0 0.0
    %279 = vmatpush.msra.mxu0 0.0
    %280 = vmatpush.msra.mxu0 0.0
    %281 = vmatpush.msra.mxu0 0.0
    %282 = vmatpush.msra.mxu0 0.0
    %283 = vmatpush.msra.mxu0 0.0
    %284 = vmatpush.msra.mxu0 0.0
    %285 = vmatpush.msra.mxu0 0.0
    %286 = vmatpush.msra.mxu0 0.0
    %287 = vmatpush.msra.mxu0 %v265
    %288 = vmatpush.msra.mxu0 %v264
    %289 = vmatmul.f32.gmra.mxu0 %v268
    %v290 = vpop.f32.mrf.mxu0
    %v291 = vadd.f32 0.0, %v290
    %292 = vmatmul.f32.gmra.mxu0 %v271
    %v293 = vpop.f32.mrf.mxu0
    %v294 = vadd.f32 0.0, %v293
    %295 = vdwg.mxu0
    %v296 = vsel %vm116, %v291, 0.0
    %297 = vadd.xlane.f32.xlu0 %v296
    %v298 = vpop.xlane.xlu0 %297
    %v299 = vsel %vm116, %v294, 0.0
    %300 = vadd.xlane.f32.xlu0 %v299
    %v301 = vpop.xlane.xlu0 %300
    %v302 = vrcp.pop 32.0
    %v303 = vmul.f32 32.0, %v302
    %v304 = vsub.f32 1.0, %v303
    %v305 = vmul.f32 %v302, %v304
    %v306 = vadd.f32 %v302, %v305
    %vm307 = vweird.f32 %v302
    %v308 = vsel %vm307, %v302, %v306
    %v309 = vmul.f32 %v298, %v308
    %v310 = vmul.f32 %v301, %v308
    %313 = vrot.lane.b32.xlu0 %v291, 64
    %v314 = vpop.permute.xlu0 %313
    %315 = vrot.lane.b32.xlu0 %v294, 64
    %v316 = vpop.permute.xlu0 %315
    %v319 = vsel %vm116, %v314, 0.0
    %320 = vadd.xlane.f32.xlu0 %v319
    %v321 = vpop.xlane.xlu0 %320
    %v322 = vsel %vm116, %v316, 0.0
    %323 = vadd.xlane.f32.xlu0 %v322
    %v324 = vpop.xlane.xlu0 %323
    %v325 = vmul.f32 %v321, %v308
    %v326 = vmul.f32 %v324, %v308
    %v327 = vmul.f32 %v309, %v309
    %v328 = vmul.f32 %v310, %v310
    %v329 = vsub.f32 %v325, %v327
    %v330 = vsub.f32 %v326, %v328
    %v331 = vmax.f32 %v329, 0.0
    %v332 = vmax.f32 %v330, 0.0
    %v333 = vsub.f32 %v250, %v309
    %v334 = vsub.f32 %v252, %v310
    %v335 = vadd.f32 %v331, 1e-05
    %v336 = vadd.f32 %v332, 1e-05
    %v337 = vrsqrt.pop %v335
    %v338 = vmul.f32 %v337, %v335
    %v339 = vmul.f32 %v338, %v337
    %v340 = vmul.f32 0.5, %v339
    %v341 = vsub.f32 1.5, %v340
    %v342 = vmul.f32 %v337, %v341
    %vm343 = vweird.f32 %v335
    %vm344 = vweird.f32 %v337
    %vm345 = vmor %vm343, %vm344
    %v346 = vsel %vm345, %v337, %v342
    %v347 = vrsqrt.pop %v336
    %v348 = vmul.f32 %v347, %v336
    %v349 = vmul.f32 %v348, %v347
    %v350 = vmul.f32 0.5, %v349
    %v351 = vsub.f32 1.5, %v350
    %v352 = vmul.f32 %v347, %v351
    %vm353 = vweird.f32 %v336
    %vm354 = vweird.f32 %v347
    %vm355 = vmor %vm353, %vm354
    %v356 = vsel %vm355, %v347, %v352
    %v357 = vmul.f32 %v333, %v346
    %v358 = vmul.f32 %v334, %v356
    %359 = vrot.lane.b32.xlu0 %v291, 96
    %v360 = vpop.permute.xlu0 %359
    %361 = vrot.lane.b32.xlu0 %v294, 96
    %v362 = vpop.permute.xlu0 %361
    %v365 = vsel %vm116, %v360, 0.0
    %366 = vadd.xlane.f32.xlu0 %v365
    %v367 = vpop.xlane.xlu0 %366
    %v368 = vsel %vm116, %v362, 0.0
    %369 = vadd.xlane.f32.xlu0 %v368
    %v370 = vpop.xlane.xlu0 %369
    %v371 = vmul.f32 %v367, %v308
    %v372 = vmul.f32 %v370, %v308
    %373 = vrot.lane.b32.xlu0 %v291, 32
    %v374 = vpop.permute.xlu0 %373
    %375 = vrot.lane.b32.xlu0 %v294, 32
    %v376 = vpop.permute.xlu0 %375
    %v379 = vsel %vm116, %v374, 0.0
    %380 = vadd.xlane.f32.xlu0 %v379
    %v381 = vpop.xlane.xlu0 %380
    %v382 = vsel %vm116, %v376, 0.0
    %383 = vadd.xlane.f32.xlu0 %v382
    %v384 = vpop.xlane.xlu0 %383
    %v385 = vmul.f32 %v381, %v308
    %v386 = vmul.f32 %v384, %v308
    %v387 = vmul.f32 %v371, %v371
    %v388 = vmul.f32 %v372, %v372
    %v389 = vsub.f32 %v385, %v387
    %v390 = vsub.f32 %v386, %v388
    %v391 = vmax.f32 %v389, 0.0
    %v392 = vmax.f32 %v390, 0.0
    %v393 = vsub.f32 %v250, %v371
    %v394 = vsub.f32 %v252, %v372
    %v395 = vadd.f32 %v391, 1e-05
    %v396 = vadd.f32 %v392, 1e-05
    %v397 = vrsqrt.pop %v395
    %v398 = vmul.f32 %v397, %v395
    %v399 = vmul.f32 %v398, %v397
    %v400 = vmul.f32 0.5, %v399
    %v401 = vsub.f32 1.5, %v400
    %v402 = vmul.f32 %v397, %v401
    %vm403 = vweird.f32 %v395
    %vm404 = vweird.f32 %v397
    %vm405 = vmor %vm403, %vm404
    %v406 = vsel %vm405, %v397, %v402
    %v407 = vrsqrt.pop %v396
    %v408 = vmul.f32 %v407, %v396
    %v409 = vmul.f32 %v408, %v407
    %v410 = vmul.f32 0.5, %v409
    %v411 = vsub.f32 1.5, %v410
    %v412 = vmul.f32 %v407, %v411
    %vm413 = vweird.f32 %v396
    %vm414 = vweird.f32 %v407
    %vm415 = vmor %vm413, %vm414
    %v416 = vsel %vm415, %v407, %v412
    %v417 = vmul.f32 %v393, %v406
    %v418 = vmul.f32 %v394, %v416
    %v419 = vsel %vm116, %v357, %v417
    %v420 = vsel %vm116, %v358, %v418
    %v421 = vld [vmem:[#allocation5 + $0x28] sm:$0xff]
    %v422 = vld [vmem:[#allocation5 + $0x30] sm:$0xff]
    %v423 = vmul.f32 %v419, %v421
    %v424 = vmul.f32 %v420, %v422
    %v425 = vadd.f32 %v192, %v423
    %v426 = vadd.f32 %v194, %v424
    %v427 = vld [vmem:[#allocation5 + $0x38] sm:$0xff]
    %v428 = vld [vmem:[#allocation5 + $0x40] sm:$0xff]
    %v429 = vadd.f32 %v425, %v427
    %v430 = vadd.f32 %v426, %v428
    %v431 = vld [vmem:[#allocation2 + $0x34] sm:$0xf]
    %v432 = vld [vmem:[#allocation2 + $0x38] sm:$0xf]
    %v433 = vld [vmem:[#allocation5 + $0x48] sm:$0xff]
    %v434 = vld [vmem:[#allocation5 + $0x50] sm:$0xff]
    %436 = vset.pattern.permute.xlu0 0
    %437 = vperm.xlu0 %436, %v433
    %v438 = vpop.permute.xlu0 %437
    %441 = vset.pattern.permute.xlu0 0
    %442 = vperm.xlu0 %441, %v434
    %v443 = vpop.permute.xlu0 %442
    %v447 = vunpack.c.l.b16 %v431
    %v448 = vunpack.c.l.b16 %v432
    %v449 = vpack.c.b16 %v448, %v447
    %v451 = vsel %vm266, %v449, 0
    %453 = vmatpush.msra.mxu0 0.0
    %454 = vmatpush.msra.mxu0 0.0
    %455 = vmatpush.msra.mxu0 0.0
    %456 = vmatpush.msra.mxu0 0.0
    %457 = vmatpush.msra.mxu0 0.0
    %458 = vmatpush.msra.mxu0 0.0
    %459 = vmatpush.msra.mxu0 0.0
    %460 = vmatpush.msra.mxu0 0.0
    %461 = vmatpush.msra.mxu0 0.0
    %462 = vmatpush.msra.mxu0 0.0
    %463 = vmatpush.msra.mxu0 0.0
    %464 = vmatpush.msra.mxu0 0.0
    %465 = vmatpush.msra.mxu0 0.0
    %466 = vmatpush.msra.mxu0 0.0
    %467 = vmatpush.msra.mxu0 %v430
    %468 = vmatpush.msra.mxu0 %v429
    %469 = vmatmul.bf16.gmra.mxu0 %v451
    %v470 = vpop.f32.mrf.mxu0
    %v471 = vadd.f32 %v438, %v470
    %v472 = vpop.f32.mrf.mxu0
    %v473 = vadd.f32 %v443, %v472
    %474 = vdwg.mxu0
    %v475 = vmax.f32 %v471, 0.0
    %v476 = vmax.f32 %v473, 0.0
    %v477 = vadd.f32 %v429, %v475
    %v478 = vadd.f32 %v430, %v476
    %v479 = vmul.f32 %v477, %v477
    %v480 = vmul.f32 %v478, %v478
    %483 = vrot.lane.b32.xlu0 %v479, 64
    %v484 = vpop.permute.xlu0 %483
    %485 = vrot.lane.b32.xlu0 %v480, 64
    %v486 = vpop.permute.xlu0 %485
    %v489 = vsel %vm236, %v477, %v484
    %v490 = vsel %vm236, %v478, %v486
    %491 = vmatpush.msra.mxu0 0.0
    %492 = vmatpush.msra.mxu0 0.0
    %493 = vmatpush.msra.mxu0 0.0
    %494 = vmatpush.msra.mxu0 0.0
    %495 = vmatpush.msra.mxu0 0.0
    %496 = vmatpush.msra.mxu0 0.0
    %497 = vmatpush.msra.mxu0 0.0
    %498 = vmatpush.msra.mxu0 0.0
    %499 = vmatpush.msra.mxu0 0.0
    %500 = vmatpush.msra.mxu0 0.0
    %501 = vmatpush.msra.mxu0 0.0
    %502 = vmatpush.msra.mxu0 0.0
    %503 = vmatpush.msra.mxu0 0.0
    %504 = vmatpush.msra.mxu0 0.0
    %505 = vmatpush.msra.mxu0 %v490
    %506 = vmatpush.msra.mxu0 %v489
    %507 = vmatmul.f32.gmra.mxu0 %v268
    %v508 = vpop.f32.mrf.mxu0
    %v509 = vadd.f32 0.0, %v508
    %510 = vmatmul.f32.gmra.mxu0 %v271
    %v511 = vpop.f32.mrf.mxu0
    %v512 = vadd.f32 0.0, %v511
    %513 = vdwg.mxu0
    %v514 = vsel %vm236, %v509, 0.0
    %515 = vadd.xlane.f32.xlu0 %v514
    %v516 = vpop.xlane.xlu0 %515
    %v517 = vsel %vm236, %v512, 0.0
    %518 = vadd.xlane.f32.xlu0 %v517
    %v519 = vpop.xlane.xlu0 %518
    %v520 = vrcp.pop 64.0
    %v521 = vmul.f32 64.0, %v520
    %v522 = vsub.f32 1.0, %v521
    %v523 = vmul.f32 %v520, %v522
    %v524 = vadd.f32 %v520, %v523
    %vm525 = vweird.f32 %v520
    %v526 = vsel %vm525, %v520, %v524
    %v527 = vmul.f32 %v516, %v526
    %v528 = vmul.f32 %v519, %v526
    %531 = vrot.lane.b32.xlu0 %v509, 64
    %v532 = vpop.permute.xlu0 %531
    %533 = vrot.lane.b32.xlu0 %v512, 64
    %v534 = vpop.permute.xlu0 %533
    %v537 = vsel %vm236, %v532, 0.0
    %538 = vadd.xlane.f32.xlu0 %v537
    %v539 = vpop.xlane.xlu0 %538
    %v540 = vsel %vm236, %v534, 0.0
    %541 = vadd.xlane.f32.xlu0 %v540
    %v542 = vpop.xlane.xlu0 %541
    %v543 = vmul.f32 %v539, %v526
    %v544 = vmul.f32 %v542, %v526
    %v545 = vmul.f32 %v527, %v527
    %v546 = vmul.f32 %v528, %v528
    %v547 = vsub.f32 %v543, %v545
    %v548 = vsub.f32 %v544, %v546
    %v549 = vmax.f32 %v547, 0.0
    %v550 = vmax.f32 %v548, 0.0
    %v551 = vsub.f32 %v477, %v527
    %v552 = vsub.f32 %v478, %v528
    %v553 = vadd.f32 %v549, 1e-05
    %v554 = vadd.f32 %v550, 1e-05
    %v555 = vrsqrt.pop %v553
    %v556 = vmul.f32 %v555, %v553
    %v557 = vmul.f32 %v556, %v555
    %v558 = vmul.f32 0.5, %v557
    %v559 = vsub.f32 1.5, %v558
    %v560 = vmul.f32 %v555, %v559
    %vm561 = vweird.f32 %v553
    %vm562 = vweird.f32 %v555
    %vm563 = vmor %vm561, %vm562
    %v564 = vsel %vm563, %v555, %v560
    %v565 = vrsqrt.pop %v554
    %v566 = vmul.f32 %v565, %v554
    %v567 = vmul.f32 %v566, %v565
    %v568 = vmul.f32 0.5, %v567
    %v569 = vsub.f32 1.5, %v568
    %v570 = vmul.f32 %v565, %v569
    %vm571 = vweird.f32 %v554
    %vm572 = vweird.f32 %v565
    %vm573 = vmor %vm571, %vm572
    %v574 = vsel %vm573, %v565, %v570
    %v575 = vmul.f32 %v551, %v564
    %v576 = vmul.f32 %v552, %v574
    %v577 = vld [vmem:[#allocation5 + $0x58] sm:$0xff]
    %v578 = vld [vmem:[#allocation5 + $0x60] sm:$0xff]
    %v579 = vmul.f32 %v575, %v577
    %v580 = vmul.f32 %v576, %v578
    %v581 = vld [vmem:[#allocation5 + $0x68] sm:$0xff]
    %v582 = vld [vmem:[#allocation5 + $0x70] sm:$0xff]
    %v583 = vadd.f32 %v579, %v581
    %v584 = vadd.f32 %v580, %v582
    %585 = vrot.lane.b32.xlu0 %v62, 64
    %v586 = vpop.permute.xlu0 %585
    %587 = vrot.lane.b32.xlu0 %v63, 64
    %v588 = vpop.permute.xlu0 %587
    %v591 = vsel %vm236, %v583, %v586
    %v592 = vsel %vm236, %v584, %v588
    %v593 = vld [vmem:[#allocation2 + $0x3c] sm:$0xf]
    %v594 = vld [vmem:[#allocation2 + $0x40] sm:$0xf]
    %v595 = vld [vmem:[#allocation2 + $0x44] sm:$0xf]
    %v596 = vld [vmem:[#allocation2 + $0x48] sm:$0xf]
    %v597 = vld [vmem:[#allocation2 + $0x4c] sm:$0xf]
    %v598 = vld [vmem:[#allocation2 + $0x50] sm:$0xf]
    %v599 = vld [vmem:[#allocation2 + $0x54] sm:$0xf]
    %v600 = vld [vmem:[#allocation2 + $0x58] sm:$0xf]
    %v601 = vld [vmem:[#allocation2 + $0x5c] sm:$0x1]
    %v602 = vpack.c.bf16 %v592, %v591
    %v603 = vld [vmem:[#allocation5 + $0x78] sm:$0x1]
    %v604 = vperm.slane %v603, 0
    %v614 = vunpack.c.l.b16 %v593
    %v615 = vunpack.c.l.b16 %v594
    %v616 = vunpack.c.l.b16 %v595
    %v617 = vunpack.c.l.b16 %v596
    %v618 = vunpack.c.l.b16 %v597
    %v619 = vunpack.c.l.b16 %v598
    %v620 = vunpack.c.l.b16 %v599
    %v621 = vunpack.c.l.b16 %v600
    %v622 = vunpack.c.l.b16 %v601
    %v623 = vpack.c.b16 %v615, %v614
    %v624 = vpack.c.b16 %v617, %v616
    %v625 = vpack.c.b16 %v619, %v618
    %v626 = vpack.c.b16 %v621, %v620
    %v627 = vpack.c.b16 %v622, %v622
    %vm632 = vcmask 539648
    %v634 = vsel %vm632, %v602, 0
    %v637 = vsel %vm70, %v627, 0
    %639 = vmatpush.bf16.msra.mxu0 0
    %640 = vmatpush.bf16.msra.mxu0 0
    %641 = vmatpush.bf16.msra.mxu0 0
    %642 = vmatpush.bf16.msra.mxu0 %v637
    %643 = vmatpush.bf16.msra.mxu0 %v626
    %644 = vmatpush.bf16.msra.mxu0 %v625
    %645 = vmatpush.bf16.msra.mxu0 %v624
    %646 = vmatpush.bf16.msra.mxu0 %v623
    %647 = vmatmul.bf16.gmra.mxu0 %v634
    %v648 = vpop.f32.mrf.mxu0
    %v649 = vadd.f32 %v604, %v648
    %v650 = vpop.f32.mrf.mxu0
    %v651 = vadd.f32 %v604, %v650
    %652 = vdwg.mxu0
    %v653 = vmax.f32 %v649, 0.0
    %v654 = vmax.f32 %v651, 0.0
    %v655 = vld [vmem:[#allocation2 + $0x60] sm:$0xf]
    %v656 = vld [vmem:[#allocation2 + $0x64] sm:$0xf]
    %v657 = vld [vmem:[#allocation2 + $0x68] sm:$0xf]
    %v658 = vld [vmem:[#allocation2 + $0x6c] sm:$0xf]
    %v659 = vpack.c.bf16 %v654, %v653
    %v660 = vld [vmem:[#allocation5 + $0x80] sm:$0x1]
    %v661 = vperm.slane %v660, 0
    %663 = vrot.lane.b32.xlu0 %v659, 96
    %v664 = vpop.permute.xlu0 %663
    %v669 = vunpack.c.l.b16 %v655
    %v670 = vunpack.c.l.b16 %v656
    %v671 = vunpack.c.l.b16 %v657
    %v672 = vunpack.c.l.b16 %v658
    %v673 = vpack.c.b16 %v670, %v669
    %v674 = vpack.c.b16 %v672, %v671
    %v678 = vsel %vm116, %v664, 0
    %680 = vmatpush.bf16.msra.mxu0 0
    %681 = vmatpush.bf16.msra.mxu0 0
    %682 = vmatpush.bf16.msra.mxu0 0
    %683 = vmatpush.bf16.msra.mxu0 0
    %684 = vmatpush.bf16.msra.mxu0 0
    %685 = vmatpush.bf16.msra.mxu0 0
    %686 = vmatpush.bf16.msra.mxu0 %v674
    %687 = vmatpush.bf16.msra.mxu0 %v673
    %688 = vmatmul.bf16.gmra.mxu0 %v678
    %v689 = vpop.f32.mrf.mxu0
    %v690 = vadd.f32 %v661, %v689
    %v691 = vpop.f32.mrf.mxu0
    %v692 = vadd.f32 %v661, %v691
    %693 = vdwg.mxu0
    %v694 = vmul.f32 %v690, %v690
    %v695 = vmul.f32 %v692, %v692
    %698 = vrot.lane.b32.xlu0 %v694, 32
    %v699 = vpop.permute.xlu0 %698
    %700 = vrot.lane.b32.xlu0 %v695, 32
    %v701 = vpop.permute.xlu0 %700
    %v704 = vsel %vm116, %v690, %v699
    %v705 = vsel %vm116, %v692, %v701
    %706 = vmatpush.msra.mxu0 0.0
    %707 = vmatpush.msra.mxu0 0.0
    %708 = vmatpush.msra.mxu0 0.0
    %709 = vmatpush.msra.mxu0 0.0
    %710 = vmatpush.msra.mxu0 0.0
    %711 = vmatpush.msra.mxu0 0.0
    %712 = vmatpush.msra.mxu0 0.0
    %713 = vmatpush.msra.mxu0 0.0
    %714 = vmatpush.msra.mxu0 0.0
    %715 = vmatpush.msra.mxu0 0.0
    %716 = vmatpush.msra.mxu0 0.0
    %717 = vmatpush.msra.mxu0 0.0
    %718 = vmatpush.msra.mxu0 0.0
    %719 = vmatpush.msra.mxu0 0.0
    %720 = vmatpush.msra.mxu0 %v705
    %721 = vmatpush.msra.mxu0 %v704
    %722 = vmatmul.f32.gmra.mxu0 %v268
    %v723 = vpop.f32.mrf.mxu0
    %v724 = vadd.f32 0.0, %v723
    %725 = vmatmul.f32.gmra.mxu0 %v271
    %v726 = vpop.f32.mrf.mxu0
    %v727 = vadd.f32 0.0, %v726
    %728 = vdwg.mxu0
    %v729 = vsel %vm116, %v724, 0.0
    %730 = vadd.xlane.f32.xlu0 %v729
    %v731 = vpop.xlane.xlu0 %730
    %v732 = vsel %vm116, %v727, 0.0
    %733 = vadd.xlane.f32.xlu0 %v732
    %v734 = vpop.xlane.xlu0 %733
    %v735 = vmul.f32 %v731, %v308
    %v736 = vmul.f32 %v734, %v308
    %739 = vrot.lane.b32.xlu0 %v724, 96
    %v740 = vpop.permute.xlu0 %739
    %741 = vrot.lane.b32.xlu0 %v727, 96
    %v742 = vpop.permute.xlu0 %741
    %v745 = vsel %vm116, %v740, 0.0
    %746 = vadd.xlane.f32.xlu0 %v745
    %v747 = vpop.xlane.xlu0 %746
    %v748 = vsel %vm116, %v742, 0.0
    %749 = vadd.xlane.f32.xlu0 %v748
    %v750 = vpop.xlane.xlu0 %749
    %v751 = vmul.f32 %v747, %v308
    %v752 = vmul.f32 %v750, %v308
    %v753 = vmul.f32 %v735, %v735
    %v754 = vmul.f32 %v736, %v736
    %v755 = vsub.f32 %v751, %v753
    %v756 = vsub.f32 %v752, %v754
    %v757 = vmax.f32 %v755, 0.0
    %v758 = vmax.f32 %v756, 0.0
    %v759 = vsub.f32 %v690, %v735
    %v760 = vsub.f32 %v692, %v736
    %v761 = vadd.f32 %v757, 1e-05
    %v762 = vadd.f32 %v758, 1e-05
    %v763 = vrsqrt.pop %v761
    %v764 = vmul.f32 %v763, %v761
    %v765 = vmul.f32 %v764, %v763
    %v766 = vmul.f32 0.5, %v765
    %v767 = vsub.f32 1.5, %v766
    %v768 = vmul.f32 %v763, %v767
    %vm769 = vweird.f32 %v761
    %vm770 = vweird.f32 %v763
    %vm771 = vmor %vm769, %vm770
    %v772 = vsel %vm771, %v763, %v768
    %v773 = vrsqrt.pop %v762
    %v774 = vmul.f32 %v773, %v762
    %v775 = vmul.f32 %v774, %v773
    %v776 = vmul.f32 0.5, %v775
    %v777 = vsub.f32 1.5, %v776
    %v778 = vmul.f32 %v773, %v777
    %vm779 = vweird.f32 %v762
    %vm780 = vweird.f32 %v773
    %vm781 = vmor %vm779, %vm780
    %v782 = vsel %vm781, %v773, %v778
    %v783 = vmul.f32 %v759, %v772
    %v784 = vmul.f32 %v760, %v782
    %v785 = vld [vmem:[#allocation5 + $0x88] sm:$0xff]
    %v786 = vld [vmem:[#allocation5 + $0x90] sm:$0xff]
    %v787 = vmul.f32 %v783, %v785
    %v788 = vmul.f32 %v784, %v786
    %v789 = vadd.f32 %v649, %v787
    %v790 = vadd.f32 %v651, %v788
    %v791 = vld [vmem:[#allocation5 + $0x98] sm:$0xff]
    %v792 = vld [vmem:[#allocation5 + $0xa0] sm:$0xff]
    %v793 = vadd.f32 %v789, %v791
    %v794 = vadd.f32 %v790, %v792
    %v795 = vld [vmem:[#allocation2 + $0x70] sm:$0xf]
    %v796 = vld [vmem:[#allocation2 + $0x74] sm:$0xf]
    %v797 = vld [vmem:[#allocation2 + $0x78] sm:$0xf]
    %v798 = vld [vmem:[#allocation2 + $0x7c] sm:$0xf]
    %v799 = vpack.c.bf16 %v794, %v793
    %v800 = vld [vmem:[#allocation5 + $0xa8] sm:$0x1]
    %v801 = vperm.slane %v800, 0
    %v806 = vunpack.c.l.b16 %v795
    %v807 = vunpack.c.l.b16 %v796
    %v808 = vunpack.c.l.b16 %v797
    %v809 = vunpack.c.l.b16 %v798
    %v810 = vpack.c.b16 %v807, %v806
    %v811 = vpack.c.b16 %v809, %v808
    %v815 = vsel %vm116, %v799, 0
    %817 = vmatpush.bf16.msra.mxu0 0
    %818 = vmatpush.bf16.msra.mxu0 0
    %819 = vmatpush.bf16.msra.mxu0 0
    %820 = vmatpush.bf16.msra.mxu0 0
    %821 = vmatpush.bf16.msra.mxu0 0
    %822 = vmatpush.bf16.msra.mxu0 0
    %823 = vmatpush.bf16.msra.mxu0 %v811
    %824 = vmatpush.bf16.msra.mxu0 %v810
    %825 = vmatmul.bf16.gmra.mxu0 %v815
    %v826 = vpop.f32.mrf.mxu0
    %v827 = vadd.f32 %v801, %v826
    %v828 = vpop.f32.mrf.mxu0
    %v829 = vadd.f32 %v801, %v828
    %830 = vdwg.mxu0
    %vm831 = vcmask 31744
    %832 = vst.msk [vmem:[#allocation7] sm:$0xff] %vm831, %v827
    %833 = vst.msk [vmem:[#allocation7 + $0x8] sm:$0xff] %vm831, %v829
    %vm834 = vcmp.gt.f32.partialorder %v827, 20.0
    %vm835 = vcmp.gt.f32.partialorder %v829, 20.0
    %v836 = vmin.f32 %v827, 20.0
    %v837 = vmin.f32 %v829, 20.0
    %v838 = vmul.f32 %v836, 1.442695
    %v839 = vpow.pop %v838
    %v840 = vmul.f32 %v837, 1.442695
    %v841 = vpow.pop %v840
    %v842 = vadd.f32 %v839, 1.0
    %v843 = vlog2.pop %v842
    %v844 = vmul.f32 %v843, 0.6931472
    %v845 = vmul.f32 -0.5, %v839
    %v846 = vadd.f32 %v845, 1.0
    %v847 = vmul.f32 %v846, %v839
    %v848 = vand.u32 2147483647, %v839
    %vm849 = vcmp.lt.f32.partialorder %v848, 0.0004427343
    %v850 = vsel %vm849, %v847, %v844
    %v851 = vadd.f32 %v841, 1.0
    %v852 = vlog2.pop %v851
    %v853 = vmul.f32 %v852, 0.6931472
    %v854 = vmul.f32 -0.5, %v841
    %v855 = vadd.f32 %v854, 1.0
    %v856 = vmul.f32 %v855, %v841
    %v857 = vand.u32 2147483647, %v841
    %vm858 = vcmp.lt.f32.partialorder %v857, 0.0004427343
    %v859 = vsel %vm858, %v856, %v853
    %v860 = vsel %vm834, %v827, %v850
    %v861 = vsel %vm835, %v829, %v859
    %vm862 = vcmask 64544
    %863 = vst.msk [vmem:[#allocation7] sm:$0xff] %vm862, %v860
    %864 = vst.msk [vmem:[#allocation7 + $0x8] sm:$0xff] %vm862, %v861
    %865 = vrot.lane.b32.xlu0 %v95, 8
    %v866 = vpop.permute.xlu0 %865
    %867 = vrot.lane.b32.xlu0 %v96, 8
    %v868 = vpop.permute.xlu0 %867
    %vm871 = vcmask 89152
    %872 = vst.msk [vmem:[#allocation7] sm:$0xff] %vm871, %v866
    %873 = vst.msk [vmem:[#allocation7 + $0x8] sm:$0xff] %vm871, %v868
    // Predicated region
    $region30: #{tpu_custom_call.1} parent=1 // pred_check
      _
    $region31: #{tpu_custom_call.1} parent=1 // pred_check_branch
      %875 = sbr.rel (0) target = $region33
    $region32: #{tpu_custom_call.1} parent=1 // pred_region
      %877 = vsyncadd [#allocation4], 0
      %s878 = sshll.u32 [#allocation7], 4
      %s879 = int_to_ptr.vmem [resolvable:$true] %s878
      %s880 = sshll.u32 %s5, 4
      %s881 = int_to_ptr.hbm [resolvable:$true] %s880
      %886 = dma.vmem_to_hbm [thread:$0]  %s879, 256, %s881, [#allocation4], 128, 128, 8
    $region33: #{tpu_custom_call.1} parent=1 // pred_fallthru
      _
    // Predicated region
    $region34: #{tpu_custom_call.1} parent=1 // pred_check
      _
    $region35: #{tpu_custom_call.1} parent=1 // pred_check_branch
      %888 = sbr.rel (0) target = $region37
    $region36: #{tpu_custom_call.1} parent=1 // pred_region
      %890 = dma.done [#allocation4], 256
    $region37: #{tpu_custom_call.1} parent=1 // pred_fallthru
      _
    %891 = vsyncpa [#allocation3], 1
    %892 = vsyncpa [#allocation6], 1
    %893 = vsyncpa [#allocation4], 1

</llo_original>
